<compile_context>
chip_gen: v5e
topology: v5e:2x2
jax: 0.10.0
libtpu: 0.0.40
codegen_flags: <defaults>
</compile_context>

<pallas_src>
import math
from functools import partial

import jax
import jax.numpy as jnp
from jax.experimental import pallas as pl
from jax.experimental.pallas import tpu as pltpu

EMBED_DIM = 32
N_HEADS = 4
HEAD_DIM = EMBED_DIM // N_HEADS
# TODO(synk): training-mode dropout on attention probabilities not implemented
#             (eval-mode / p=0 identity, as in nn.Dropout.eval()).
# TODO(synk): the module's self.attn_scores side-attribute is not returned.


def _mha_kernel(q_ref, k_ref, v_ref, bias_ref, wqkv_ref, wo_ref, bo_ref,
                out_ref, *, bblk, seq, n_heads, head_dim):
    E = n_heads * head_dim
    G = n_heads * bblk                       # fused (head, batch) leading axis
    TM = bblk * seq
    f32, bf16 = jnp.float32, jnp.bfloat16

    # (1) Fused Q/K/V projection: assemble the (TM, 3E) slab in VMEM from the
    # three already-resident input tiles (lane-offset copies, cast to bf16 for
    # the MXU's native path) and hit the block-diagonal (3E, 3E) weight once.
    # f32 accumulation; the score scale is already folded into the Q block.
    x = jnp.concatenate([q_ref[...].astype(bf16),
                         k_ref[...].astype(bf16),
                         v_ref[...].astype(bf16)], axis=-1)      # (TM, 3E)
    proj = jnp.dot(x, wqkv_ref[...], preferred_element_type=f32)  # (TM, 3E) f32

    # (2) Head split to the g = h*bblk + b leading axis.  Feature order in
    # proj is [q-h0..q-h(H-1), k-h0.., v-h0..], so the 3H D-wide lane slices
    # + one leading-axis concat give (3G, S, D) with per-tensor blocks.
    # (An arbitrary 4-D transpose to g-major does not lower on Mosaic, so the
    #  relayout stays in this slice+concat form; the inverse merge relayout is
    #  avoided entirely by folding it into W_o in step (7).)
    pieces = [
        proj[:, j * head_dim:(j + 1) * head_dim].reshape(bblk, seq, head_dim)
        for j in range(3 * n_heads)
    ]
    t = jnp.concatenate(pieces, axis=0)                           # (3G, S, D)
    qg = t[0:G].astype(bf16)
    kg = t[G:2 * G].astype(bf16)
    vg = t[2 * G:3 * G].astype(bf16)

    # (3) Batched scores for all (head, batch) pairs at once; contraction on
    # the last dim of both operands (no materialized k^T); bf16 MXU operands,
    # f32 accumulation.
    s = jnp.einsum("gqd,gkd->gqk", qg, kg,
                   preferred_element_type=f32)                    # (G, S, S)

    # (4) Mask: additive f32 bias (0 / -1e30) from the wrapper; one vadd,
    # broadcast over heads (leading-dim reshapes only, minor dims untouched).
    s = (s.reshape(n_heads, bblk, seq, seq) + bias_ref[...][None, :, :, :]
         ).reshape(G, seq, seq)

    # (5) Softmax in f32; reciprocal on the EUP + one Newton refinement step.
    m = jnp.max(s, axis=-1, keepdims=True)
    e = jnp.exp(s - m)
    l = jnp.sum(e, axis=-1, keepdims=True)
    r = pl.reciprocal(l, approx=True)
    r = r * (2.0 - l * r)
    p = (e * r).astype(bf16)

    # (6) Context per (head, batch) pair.
    ctx = jnp.einsum("gqk,gkd->gqd", p, vg,
                     preferred_element_type=f32)                  # (G, S, D)

    # (7) Output projection with the head-merge permutation folded into W_o
    # (wo_ref is (H, D, E), rows grouped head-major as in torch's merged
    # .view): leading-axis slices only, no lane concat; f32 accumulate + bias.
    acc = jnp.broadcast_to(bo_ref[...].astype(f32), (TM, E))
    for h in range(n_heads):
        ctx_h = ctx[h * bblk:(h + 1) * bblk].reshape(TM, head_dim).astype(bf16)
        acc = acc + jnp.dot(ctx_h, wo_ref[h], preferred_element_type=f32)
    out_ref[...] = acc.astype(out_ref.dtype)


def multi_head_attention(q, k, v, mask, wq_t, wk_t, wv_t, wo_t, bo,
                         *, block_batch=None):
    """q, k, v: (B, S, E) float32.
    mask: (B, S, S) integer, nonzero == masked; broadcast over heads in-kernel.
    wq_t/wk_t/wv_t/wo_t: (E, E) pre-transposed to (in, out); bo: (1, E)."""
    B, S, E = q.shape
    H, D = N_HEADS, HEAD_DIM

    # --- block_batch selection: >= 2 grid steps (megacore + pipelining),
    # ~4 steps for larger batches, capped so the per-step f32 score/exp/prob
    # intermediates + double-buffered I/O tiles stay well inside scoped VMEM
    # on every generation (16 MiB v5e default scoped, 64 MiB v7x physical).
    if block_batch is None:
        per_batch_bytes = 4 * H * S * S * 4 + 2 * 3 * S * E * 4   # scores + I/O
        vmem_cap = max(1, (6 << 20) // per_batch_bytes)
        target_steps = 2 if B <= 4 else 4
        bblk = 1
        for d in range(1, B + 1):
            if B % d == 0 and d <= vmem_cap and (B // d) >= min(target_steps, B):
                bblk = d                    # largest divisor meeting constraints
    else:
        bblk = block_batch
    assert B % bblk == 0, "block_batch must divide batch"
    TM, G = bblk * S, H * bblk

    # --- explicit VMEM limit with headroom (generation-portable).
    io_bytes = 2 * (3 * TM * E * 4 + bblk * S * S * 4 + TM * E * 4)
    work_bytes = (TM * 3 * E * 6 + 3 * G * S * D * 4 + 4 * G * S * S * 4
                  + G * S * D * 4 + 2 * TM * E * 4)
    weight_bytes = (3 * E) * (3 * E) * 2 + H * D * E * 2 + E * 4
    vmem_limit = int(min(max(2 * (io_bytes + work_bytes + weight_bytes),
                             8 << 20), 64 << 20))

    # --- weights prepared at trace time (tiny, one-off):
    # block-diagonal fused QKV weight in bf16, score scale folded into Q.
    scale = 1.0 / math.sqrt(D)
    z = jnp.zeros((E, E), jnp.float32)
    w_qkv = jnp.concatenate([
        jnp.concatenate([wq_t * scale, z, z], axis=1),
        jnp.concatenate([z, wk_t, z], axis=1),
        jnp.concatenate([z, z, wv_t], axis=1),
    ], axis=0).astype(jnp.bfloat16)                               # (3E, 3E)
    wo_heads = wo_t.reshape(H, D, E).astype(jnp.bfloat16)         # (H, D, E)
    bo32 = bo.astype(jnp.float32)

    # Additive mask bias; finite -1e30 instead of -inf avoids NaN rows.
    bias = jnp.where(mask != 0, jnp.float32(-1e30), jnp.float32(0.0))

    # Activations stay f32 in HBM (cast to bf16 in-kernel); no fused qkv
    # concat materialized in HBM.
    q2d = q.reshape(B * S, E)
    k2d = k.reshape(B * S, E)
    v2d = v.reshape(B * S, E)

    kernel = partial(_mha_kernel, bblk=bblk, seq=S, n_heads=H, head_dim=D)

    out2d = pl.pallas_call(
        kernel,
        out_shape=jax.ShapeDtypeStruct((B * S, E), q.dtype),
        grid=(B // bblk,),
        in_specs=[
            pl.BlockSpec((TM, E), lambda i: (i, 0)),              # q
            pl.BlockSpec((TM, E), lambda i: (i, 0)),              # k
            pl.BlockSpec((TM, E), lambda i: (i, 0)),              # v
            pl.BlockSpec((bblk, S, S), lambda i: (i, 0, 0)),      # mask bias f32
            pl.BlockSpec((3 * E, 3 * E), lambda i: (0, 0)),       # fused W_qkv
            pl.BlockSpec((H, D, E), lambda i: (0, 0, 0)),         # W_o per head
            pl.BlockSpec((1, E), lambda i: (0, 0)),               # b_o
        ],
        out_specs=pl.BlockSpec((TM, E), lambda i: (i, 0)),
        compiler_params=pltpu.CompilerParams(
            dimension_semantics=("parallel",),
            vmem_limit_bytes=vmem_limit),
    )(q2d, k2d, v2d, bias, w_qkv, wo_heads, bo32)

    return out2d.reshape(B, S, E)


def reference(q, k, v, mask, wq_t, wk_t, wv_t, wo_t, bo):
    """Pure-JAX f32 reference mirroring the PyTorch forward (mask: (B, S, S))."""
    B, S, E = q.shape
    H, D = N_HEADS, HEAD_DIM
    qp = (q @ wq_t).reshape(B, S, H, D).transpose(0, 2, 1, 3)
    kp = (k @ wk_t).reshape(B, S, H, D).transpose(0, 2, 1, 3)
    vp = (v @ wv_t).reshape(B, S, H, D).transpose(0, 2, 1, 3)
    s = jnp.einsum("bhqd,bhkd->bhqk", qp, kp) / math.sqrt(D)
    s = jnp.where(mask[:, None, :, :] != 0, -jnp.inf, s)
    p = jax.nn.softmax(s, axis=-1)
    x = jnp.einsum("bhqk,bhkd->bhqd", p, vp)
    x = x.transpose(0, 2, 1, 3).reshape(B, S, E)
    return x @ wo_t + bo


if __name__ == "__main__":
    B, S, E, H = 2, 8, EMBED_DIM, N_HEADS

    key = jax.random.PRNGKey(0)
    kq, kk, kv, kwq, kwk, kwv, kwo, kbo = jax.random.split(key, 8)

    q = jax.random.normal(kq, (B, S, E), dtype=jnp.float32)
    k = jax.random.normal(kk, (B, S, E), dtype=jnp.float32)
    v = jax.random.normal(kv, (B, S, E), dtype=jnp.float32)

    # Deterministic "nn.Linear"-style weights, stored pre-transposed (in, out).
    wscale = 1.0 / math.sqrt(E)
    wq_t = jax.random.uniform(kwq, (E, E), jnp.float32, -wscale, wscale)
    wk_t = jax.random.uniform(kwk, (E, E), jnp.float32, -wscale, wscale)
    wv_t = jax.random.uniform(kwv, (E, E), jnp.float32, -wscale, wscale)
    wo_t = jax.random.uniform(kwo, (E, E), jnp.float32, -wscale, wscale)
    bo = jax.random.uniform(kbo, (1, E), jnp.float32, -wscale, wscale)

    # Causal mask (1 == position is masked out), broadcast over heads in-kernel.
    causal = (jnp.arange(S)[None, :] > jnp.arange(S)[:, None]).astype(jnp.int8)
    mask = jnp.broadcast_to(causal, (B, S, S))

    out = multi_head_attention(q, k, v, mask, wq_t, wk_t, wv_t, wo_t, bo)
    out = jax.block_until_ready(out)

    ref = reference(q, k, v, mask, wq_t, wk_t, wv_t, wo_t, bo)
    assert out.shape == (B, S, E)
    # Tolerance reflects bf16 MXU operands (f32 accumulation) vs the full-f32
    # reference; observed error is typically ~1e-2 absolute on O(0.3) outputs.
    assert jnp.allclose(out, ref, atol=5e-2, rtol=5e-2), "mismatch vs reference"

    print("KERNEL_OK")
</pallas_src>

<mosaic_0001>
module attributes {stable_mosaic.version = 11 : i64} {
  func.func @_mha_kernel(%arg0: i32, %arg1: memref<8x32xf32, #tpu.memory_space<vmem>>, %arg2: memref<8x32xf32, #tpu.memory_space<vmem>>, %arg3: memref<8x32xf32, #tpu.memory_space<vmem>>, %arg4: memref<1x8x8xf32, #tpu.memory_space<vmem>>, %arg5: memref<96x96xbf16, #tpu.memory_space<vmem>>, %arg6: memref<4x8x32xbf16, #tpu.memory_space<vmem>>, %arg7: memref<1x32xf32, #tpu.memory_space<vmem>>, %arg8: memref<8x32xf32, #tpu.memory_space<vmem>>) attributes {dimension_semantics = [#tpu.dimension_semantics<parallel>], iteration_bounds = array<i64: 2>, scalar_prefetch = 0 : i64, scratch_operands = 0 : i64, tpu.core_type = #tpu.core_type<tc>, window_params = [{transform_indices = @transform_0, window_bounds = array<i64: 8, 32>}, {transform_indices = @transform_1, window_bounds = array<i64: 8, 32>}, {transform_indices = @transform_2, window_bounds = array<i64: 8, 32>}, {transform_indices = @transform_3, window_bounds = array<i64: 1, 8, 8>}, {pipeline_mode = #tpu.pipeline_mode<synchronous>, transform_indices = @transform_4, window_bounds = array<i64: 96, 96>}, {pipeline_mode = #tpu.pipeline_mode<synchronous>, transform_indices = @transform_5, window_bounds = array<i64: 4, 8, 32>}, {pipeline_mode = #tpu.pipeline_mode<synchronous>, transform_indices = @transform_6, window_bounds = array<i64: 1, 32>}, {transform_indices = @transform_7, window_bounds = array<i64: 8, 32>}]} {
    %c0 = arith.constant 0 : index
    %c0_0 = arith.constant 0 : index
    %0 = vector.load %arg1[%c0, %c0_0] : memref<8x32xf32, #tpu.memory_space<vmem>>, vector<8x32xf32>
    %1 = arith.truncf %0 : vector<8x32xf32> to vector<8x32xbf16>
    %c0_1 = arith.constant 0 : index
    %c0_2 = arith.constant 0 : index
    %2 = vector.load %arg2[%c0_1, %c0_2] : memref<8x32xf32, #tpu.memory_space<vmem>>, vector<8x32xf32>
    %3 = arith.truncf %2 : vector<8x32xf32> to vector<8x32xbf16>
    %c0_3 = arith.constant 0 : index
    %c0_4 = arith.constant 0 : index
    %4 = vector.load %arg3[%c0_3, %c0_4] : memref<8x32xf32, #tpu.memory_space<vmem>>, vector<8x32xf32>
    %5 = arith.truncf %4 : vector<8x32xf32> to vector<8x32xbf16>
    %6 = tpu.concatenate %1, %3, %5 in 1 : vector<8x32xbf16>, vector<8x32xbf16>, vector<8x32xbf16> -> vector<8x96xbf16>
    %c0_5 = arith.constant 0 : index
    %c0_6 = arith.constant 0 : index
    %7 = vector.load %arg5[%c0_5, %c0_6] : memref<96x96xbf16, #tpu.memory_space<vmem>>, vector<96x96xbf16>
    %cst = arith.constant dense<0.000000e+00> : vector<8x96xf32>
    %8 = tpu.matmul %6, %7, %cst {dimension_numbers = #tpu.dot_dimension_numbers<[1], [0], [0], [1], [0, 0, 1, 1], [], []>} : vector<8x96xbf16>, vector<96x96xbf16>, vector<8x96xf32> -> vector<8x96xf32>
    %9 = vector.extract_strided_slice %8 {offsets = [0, 0], sizes = [8, 8], strides = [1, 1]} : vector<8x96xf32> to vector<8x8xf32>
    %10 = vector.shape_cast %9 : vector<8x8xf32> to vector<1x8x8xf32>
    %11 = vector.extract_strided_slice %8 {offsets = [0, 8], sizes = [8, 8], strides = [1, 1]} : vector<8x96xf32> to vector<8x8xf32>
    %12 = vector.shape_cast %11 : vector<8x8xf32> to vector<1x8x8xf32>
    %13 = vector.extract_strided_slice %8 {offsets = [0, 16], sizes = [8, 8], strides = [1, 1]} : vector<8x96xf32> to vector<8x8xf32>
    %14 = vector.shape_cast %13 : vector<8x8xf32> to vector<1x8x8xf32>
    %15 = vector.extract_strided_slice %8 {offsets = [0, 24], sizes = [8, 8], strides = [1, 1]} : vector<8x96xf32> to vector<8x8xf32>
    %16 = vector.shape_cast %15 : vector<8x8xf32> to vector<1x8x8xf32>
    %17 = vector.extract_strided_slice %8 {offsets = [0, 32], sizes = [8, 8], strides = [1, 1]} : vector<8x96xf32> to vector<8x8xf32>
    %18 = vector.shape_cast %17 : vector<8x8xf32> to vector<1x8x8xf32>
    %19 = vector.extract_strided_slice %8 {offsets = [0, 40], sizes = [8, 8], strides = [1, 1]} : vector<8x96xf32> to vector<8x8xf32>
    %20 = vector.shape_cast %19 : vector<8x8xf32> to vector<1x8x8xf32>
    %21 = vector.extract_strided_slice %8 {offsets = [0, 48], sizes = [8, 8], strides = [1, 1]} : vector<8x96xf32> to vector<8x8xf32>
    %22 = vector.shape_cast %21 : vector<8x8xf32> to vector<1x8x8xf32>
    %23 = vector.extract_strided_slice %8 {offsets = [0, 56], sizes = [8, 8], strides = [1, 1]} : vector<8x96xf32> to vector<8x8xf32>
    %24 = vector.shape_cast %23 : vector<8x8xf32> to vector<1x8x8xf32>
    %25 = vector.extract_strided_slice %8 {offsets = [0, 64], sizes = [8, 8], strides = [1, 1]} : vector<8x96xf32> to vector<8x8xf32>
    %26 = vector.shape_cast %25 : vector<8x8xf32> to vector<1x8x8xf32>
    %27 = vector.extract_strided_slice %8 {offsets = [0, 72], sizes = [8, 8], strides = [1, 1]} : vector<8x96xf32> to vector<8x8xf32>
    %28 = vector.shape_cast %27 : vector<8x8xf32> to vector<1x8x8xf32>
    %29 = vector.extract_strided_slice %8 {offsets = [0, 80], sizes = [8, 8], strides = [1, 1]} : vector<8x96xf32> to vector<8x8xf32>
    %30 = vector.shape_cast %29 : vector<8x8xf32> to vector<1x8x8xf32>
    %31 = vector.extract_strided_slice %8 {offsets = [0, 88], sizes = [8, 8], strides = [1, 1]} : vector<8x96xf32> to vector<8x8xf32>
    %32 = vector.shape_cast %31 : vector<8x8xf32> to vector<1x8x8xf32>
    %33 = tpu.concatenate %10, %12, %14, %16, %18, %20, %22, %24, %26, %28, %30, %32 in 0 : vector<1x8x8xf32>, vector<1x8x8xf32>, vector<1x8x8xf32>, vector<1x8x8xf32>, vector<1x8x8xf32>, vector<1x8x8xf32>, vector<1x8x8xf32>, vector<1x8x8xf32>, vector<1x8x8xf32>, vector<1x8x8xf32>, vector<1x8x8xf32>, vector<1x8x8xf32> -> vector<12x8x8xf32>
    %34 = vector.extract_strided_slice %33 {offsets = [0, 0, 0], sizes = [4, 8, 8], strides = [1, 1, 1]} : vector<12x8x8xf32> to vector<4x8x8xf32>
    %35 = arith.truncf %34 : vector<4x8x8xf32> to vector<4x8x8xbf16>
    %36 = vector.extract_strided_slice %33 {offsets = [4, 0, 0], sizes = [4, 8, 8], strides = [1, 1, 1]} : vector<12x8x8xf32> to vector<4x8x8xf32>
    %37 = arith.truncf %36 : vector<4x8x8xf32> to vector<4x8x8xbf16>
    %38 = vector.extract_strided_slice %33 {offsets = [8, 0, 0], sizes = [4, 8, 8], strides = [1, 1, 1]} : vector<12x8x8xf32> to vector<4x8x8xf32>
    %39 = arith.truncf %38 : vector<4x8x8xf32> to vector<4x8x8xbf16>
    "tpu.trace_start"() <{level = 10 : i32, message = "gqd,gkd->gqk"}> : () -> ()
    %cst_7 = arith.constant dense<0.000000e+00> : vector<4x8x8xf32>
    %40 = tpu.matmul %35, %37, %cst_7 {dimension_numbers = #tpu.dot_dimension_numbers<[2], [2], [1], [1], [0, 0, 0, 1, 1, 1], [0], [0]>} : vector<4x8x8xbf16>, vector<4x8x8xbf16>, vector<4x8x8xf32> -> vector<4x8x8xf32>
    "tpu.trace_stop"() : () -> ()
    %41 = vector.shape_cast %40 : vector<4x8x8xf32> to vector<4x1x8x8xf32>
    %c0_8 = arith.constant 0 : index
    %c0_9 = arith.constant 0 : index
    %c0_10 = arith.constant 0 : index
    %42 = vector.load %arg4[%c0_8, %c0_9, %c0_10] : memref<1x8x8xf32, #tpu.memory_space<vmem>>, vector<1x8x8xf32>
    %43 = vector.shape_cast %42 : vector<1x8x8xf32> to vector<1x1x8x8xf32>
    %44 = vector.broadcast %43 : vector<1x1x8x8xf32> to vector<4x1x8x8xf32>
    %45 = arith.addf %41, %44 : vector<4x1x8x8xf32>
    %46 = vector.shape_cast %45 : vector<4x1x8x8xf32> to vector<4x8x8xf32>
    %cst_11 = arith.constant dense<0xFF800000> : vector<4x8xf32>
    %47 = vector.multi_reduction <maximumf>, %46, %cst_11 [2] : vector<4x8x8xf32> to vector<4x8xf32>
    %48 = vector.shape_cast %47 : vector<4x8xf32> to vector<4x8x1xf32>
    %49 = vector.broadcast %48 : vector<4x8x1xf32> to vector<4x8x8xf32>
    %50 = arith.subf %46, %49 : vector<4x8x8xf32>
    %51 = math.exp %50 : vector<4x8x8xf32>
    %cst_12 = arith.constant dense<0.000000e+00> : vector<4x8xf32>
    %52 = vector.multi_reduction <add>, %51, %cst_12 [2] : vector<4x8x8xf32> to vector<4x8xf32>
    %53 = vector.shape_cast %52 : vector<4x8xf32> to vector<4x8x1xf32>
    %54 = tpu.reciprocal %53 {approx = true} : vector<4x8x1xf32> -> vector<4x8x1xf32>
    %55 = arith.mulf %53, %54 : vector<4x8x1xf32>
    %cst_13 = arith.constant 2.000000e+00 : f32
    %56 = vector.broadcast %cst_13 : f32 to vector<4x8x1xf32>
    %57 = arith.subf %56, %55 : vector<4x8x1xf32>
    %58 = arith.mulf %54, %57 : vector<4x8x1xf32>
    %59 = vector.broadcast %58 : vector<4x8x1xf32> to vector<4x8x8xf32>
    %60 = arith.mulf %51, %59 : vector<4x8x8xf32>
    %61 = arith.truncf %60 : vector<4x8x8xf32> to vector<4x8x8xbf16>
    "tpu.trace_start"() <{level = 10 : i32, message = "gqk,gkd->gqd"}> : () -> ()
    %cst_14 = arith.constant dense<0.000000e+00> : vector<4x8x8xf32>
    %62 = tpu.matmul %61, %39, %cst_14 {dimension_numbers = #tpu.dot_dimension_numbers<[2], [1], [1], [2], [0, 0, 0, 1, 1, 2], [0], [0]>} : vector<4x8x8xbf16>, vector<4x8x8xbf16>, vector<4x8x8xf32> -> vector<4x8x8xf32>
    "tpu.trace_stop"() : () -> ()
    %c0_15 = arith.constant 0 : index
    %c0_16 = arith.constant 0 : index
    %63 = vector.load %arg7[%c0_15, %c0_16] : memref<1x32xf32, #tpu.memory_space<vmem>>, vector<1x32xf32>
    %64 = vector.shape_cast %63 : vector<1x32xf32> to vector<1x32xf32>
    %65 = vector.broadcast %64 : vector<1x32xf32> to vector<8x32xf32>
    %66 = vector.extract_strided_slice %62 {offsets = [0, 0, 0], sizes = [1, 8, 8], strides = [1, 1, 1]} : vector<4x8x8xf32> to vector<1x8x8xf32>
    %67 = vector.shape_cast %66 : vector<1x8x8xf32> to vector<8x8xf32>
    %68 = arith.truncf %67 : vector<8x8xf32> to vector<8x8xbf16>
    %c0_17 = arith.constant 0 : index
    %c0_18 = arith.constant 0 : index
    %c0_19 = arith.constant 0 : index
    %69 = vector.load %arg6[%c0_17, %c0_18, %c0_19] : memref<4x8x32xbf16, #tpu.memory_space<vmem>>, vector<1x8x32xbf16>
    %70 = vector.shape_cast %69 : vector<1x8x32xbf16> to vector<8x32xbf16>
    %cst_20 = arith.constant dense<0.000000e+00> : vector<8x32xf32>
    %71 = tpu.matmul %68, %70, %cst_20 {dimension_numbers = #tpu.dot_dimension_numbers<[1], [0], [0], [1], [0, 0, 1, 1], [], []>} : vector<8x8xbf16>, vector<8x32xbf16>, vector<8x32xf32> -> vector<8x32xf32>
    %72 = arith.addf %65, %71 : vector<8x32xf32>
    %73 = vector.extract_strided_slice %62 {offsets = [1, 0, 0], sizes = [1, 8, 8], strides = [1, 1, 1]} : vector<4x8x8xf32> to vector<1x8x8xf32>
    %74 = vector.shape_cast %73 : vector<1x8x8xf32> to vector<8x8xf32>
    %75 = arith.truncf %74 : vector<8x8xf32> to vector<8x8xbf16>
    %c1 = arith.constant 1 : index
    %c0_21 = arith.constant 0 : index
    %c0_22 = arith.constant 0 : index
    %76 = vector.load %arg6[%c1, %c0_21, %c0_22] : memref<4x8x32xbf16, #tpu.memory_space<vmem>>, vector<1x8x32xbf16>
    %77 = vector.shape_cast %76 : vector<1x8x32xbf16> to vector<8x32xbf16>
    %cst_23 = arith.constant dense<0.000000e+00> : vector<8x32xf32>
    %78 = tpu.matmul %75, %77, %cst_23 {dimension_numbers = #tpu.dot_dimension_numbers<[1], [0], [0], [1], [0, 0, 1, 1], [], []>} : vector<8x8xbf16>, vector<8x32xbf16>, vector<8x32xf32> -> vector<8x32xf32>
    %79 = arith.addf %72, %78 : vector<8x32xf32>
    %80 = vector.extract_strided_slice %62 {offsets = [2, 0, 0], sizes = [1, 8, 8], strides = [1, 1, 1]} : vector<4x8x8xf32> to vector<1x8x8xf32>
    %81 = vector.shape_cast %80 : vector<1x8x8xf32> to vector<8x8xf32>
    %82 = arith.truncf %81 : vector<8x8xf32> to vector<8x8xbf16>
    %c2 = arith.constant 2 : index
    %c0_24 = arith.constant 0 : index
    %c0_25 = arith.constant 0 : index
    %83 = vector.load %arg6[%c2, %c0_24, %c0_25] : memref<4x8x32xbf16, #tpu.memory_space<vmem>>, vector<1x8x32xbf16>
    %84 = vector.shape_cast %83 : vector<1x8x32xbf16> to vector<8x32xbf16>
    %cst_26 = arith.constant dense<0.000000e+00> : vector<8x32xf32>
    %85 = tpu.matmul %82, %84, %cst_26 {dimension_numbers = #tpu.dot_dimension_numbers<[1], [0], [0], [1], [0, 0, 1, 1], [], []>} : vector<8x8xbf16>, vector<8x32xbf16>, vector<8x32xf32> -> vector<8x32xf32>
    %86 = arith.addf %79, %85 : vector<8x32xf32>
    %87 = vector.extract_strided_slice %62 {offsets = [3, 0, 0], sizes = [1, 8, 8], strides = [1, 1, 1]} : vector<4x8x8xf32> to vector<1x8x8xf32>
    %88 = vector.shape_cast %87 : vector<1x8x8xf32> to vector<8x8xf32>
    %89 = arith.truncf %88 : vector<8x8xf32> to vector<8x8xbf16>
    %c3 = arith.constant 3 : index
    %c0_27 = arith.constant 0 : index
    %c0_28 = arith.constant 0 : index
    %90 = vector.load %arg6[%c3, %c0_27, %c0_28] : memref<4x8x32xbf16, #tpu.memory_space<vmem>>, vector<1x8x32xbf16>
    %91 = vector.shape_cast %90 : vector<1x8x32xbf16> to vector<8x32xbf16>
    %cst_29 = arith.constant dense<0.000000e+00> : vector<8x32xf32>
    %92 = tpu.matmul %89, %91, %cst_29 {dimension_numbers = #tpu.dot_dimension_numbers<[1], [0], [0], [1], [0, 0, 1, 1], [], []>} : vector<8x8xbf16>, vector<8x32xbf16>, vector<8x32xf32> -> vector<8x32xf32>
    %93 = arith.addf %86, %92 : vector<8x32xf32>
    %c0_30 = arith.constant 0 : index
    %c0_31 = arith.constant 0 : index
    %94 = vector.load %arg8[%c0_30, %c0_31] : memref<8x32xf32, #tpu.memory_space<vmem>>, vector<8x32xf32>
    tpu.vector_store %arg8[%c0_30, %c0_31], %93 {strides = array<i32>} : memref<8x32xf32, #tpu.memory_space<vmem>>, vector<8x32xf32>,
    return
  }
  func.func @transform_0(%arg0: i32) -> (i32, i32) {
    %c0_i32 = arith.constant 0 : i32
    %c0_i32_0 = arith.constant 0 : i32
    return %arg0, %c0_i32 : i32, i32
  }
  func.func @transform_1(%arg0: i32) -> (i32, i32) {
    %c0_i32 = arith.constant 0 : i32
    %c0_i32_0 = arith.constant 0 : i32
    return %arg0, %c0_i32 : i32, i32
  }
  func.func @transform_2(%arg0: i32) -> (i32, i32) {
    %c0_i32 = arith.constant 0 : i32
    %c0_i32_0 = arith.constant 0 : i32
    return %arg0, %c0_i32 : i32, i32
  }
  func.func @transform_3(%arg0: i32) -> (i32, i32, i32) {
    %c0_i32 = arith.constant 0 : i32
    %c0_i32_0 = arith.constant 0 : i32
    %c0_i32_1 = arith.constant 0 : i32
    return %arg0, %c0_i32, %c0_i32_0 : i32, i32, i32
  }
  func.func @transform_4(%arg0: i32) -> (i32, i32) {
    %c0_i32 = arith.constant 0 : i32
    %c0_i32_0 = arith.constant 0 : i32
    %c0_i32_1 = arith.constant 0 : i32
    return %c0_i32, %c0_i32_0 : i32, i32
  }
  func.func @transform_5(%arg0: i32) -> (i32, i32, i32) {
    %c0_i32 = arith.constant 0 : i32
    %c0_i32_0 = arith.constant 0 : i32
    %c0_i32_1 = arith.constant 0 : i32
    %c0_i32_2 = arith.constant 0 : i32
    return %c0_i32, %c0_i32_0, %c0_i32_1 : i32, i32, i32
  }
  func.func @transform_6(%arg0: i32) -> (i32, i32) {
    %c0_i32 = arith.constant 0 : i32
    %c0_i32_0 = arith.constant 0 : i32
    %c0_i32_1 = arith.constant 0 : i32
    return %c0_i32, %c0_i32_0 : i32, i32
  }
  func.func @transform_7(%arg0: i32) -> (i32, i32) {
    %c0_i32 = arith.constant 0 : i32
    %c0_i32_0 = arith.constant 0 : i32
    return %arg0, %c0_i32 : i32, i32
  }
}

</mosaic_0001>

<llo_original>
// kernel: tpu_custom_call.1
$region0: #{tpu_custom_call.1}
  #allocation0 [shape = 'u32[]', space=smem, size = 0x4, offset = 0x4, fixed_abs, tag = 'smem constant byte address 0x4 - core index']
  #allocation1 [shape = 'u32[72,128]{1,0:T(1,128)}', space=vmem, size = 0x9000, scoped, tag = 'internal scratch']
  %s0 = inlined_call_operand.hbm [shape: f32[16,32], index: 0, kind: input, shape index: {}]
  %s1 = inlined_call_operand.hbm [shape: f32[16,32], index: 1, kind: input, shape index: {}]
  %s2 = inlined_call_operand.hbm [shape: f32[16,32], index: 2, kind: input, shape index: {}]
  %s3 = inlined_call_operand.hbm [shape: f32[2,8,8], index: 3, kind: input, shape index: {}]
  %s4 = inlined_call_operand.hbm [shape: bf16[96,96], index: 4, kind: input, shape index: {}]
  %s5 = inlined_call_operand.hbm [shape: bf16[4,8,32], index: 5, kind: input, shape index: {}]
  %s6 = inlined_call_operand.vmem [shape: f32[1,32], index: 6, kind: input, shape index: {}]
  %s7 = inlined_call_operand.hbm [shape: f32[16,32], index: 7, kind: output, shape index: {}]
  %s8 = sld [smem:[#allocation0]]
  $region85: #{tpu_custom_call.1} parent=0
    _
  %s10 = ssub.s32 1, %s8
  %s11 = scalar_select 0, %s10, %s8
  $region1: #{tpu_custom_call.1} parent=0
    #allocation2 [shape = 'u8[8192]{0}', space=vmem, size = 0x2000, scoped, tag = 'input window, operand 0']
    #allocation3 [shape = 's32[2]{0}', space=sflag, size = 0x8, scoped, tag = 'scoped memory for tpu_custom_call.1']
    #allocation4 [shape = 's32[2]{0}', space=sflag, size = 0x8, scoped, tag = 'scoped memory for tpu_custom_call.1']
    #allocation5 [shape = 'u8[8192]{0}', space=vmem, size = 0x2000, scoped, tag = 'input window, operand 1']
    #allocation6 [shape = 's32[2]{0}', space=sflag, size = 0x8, scoped, tag = 'scoped memory for tpu_custom_call.1']
    #allocation7 [shape = 'u8[8192]{0}', space=vmem, size = 0x2000, scoped, tag = 'input window, operand 2']
    #allocation8 [shape = 'u8[8192]{0}', space=vmem, size = 0x2000, scoped, tag = 'input window, operand 3']
    #allocation9 [shape = 's32[2]{0}', space=sflag, size = 0x8, scoped, tag = 'scoped memory for tpu_custom_call.1']
    #allocation10 [shape = 'u8[24576]{0}', space=vmem, size = 0x6000, scoped, tag = 'input window, operand 4, single buffered']
    #allocation11 [shape = 'u8[8192]{0}', space=vmem, size = 0x2000, scoped, tag = 'input window, operand 5, single buffered']
    #allocation12 [shape = 's32[1]{0}', space=sflag, size = 0x4, scoped, tag = 'scoped memory for tpu_custom_call.1']
    #allocation13 [shape = 'u8[8192]{0}', space=vmem, size = 0x2000, scoped, tag = 'output window, operand 0']
    %12 = vsyncpa [#allocation3], 0
    %s13 = scalar_lea.sflag [#allocation3], 1
    %14 = vsyncpa %s13, 0
    %15 = vsyncpa [#allocation6], 0
    %s16 = scalar_lea.sflag [#allocation6], 1
    %17 = vsyncpa %s16, 0
    %18 = vsyncpa [#allocation9], 0
    %s19 = scalar_lea.sflag [#allocation9], 1
    %20 = vsyncpa %s19, 0
    %21 = vsyncpa [#allocation12], 0
    %22 = vsyncpa [#allocation4], 0
    %s23 = scalar_lea.sflag [#allocation4], 1
    %24 = vsyncpa %s23, 0
    loop: start=0, step=1, limit=4
    $region2: #{tpu_custom_call.1} parent=1 // loop_pre_header
      _
    $region3: #{tpu_custom_call.1} parent=1 // loop_header
      %s26 = sphi 0, %s30
      %p27 = scmp.ge.s32.totalorder %s26, 4
      %s36 = sphi 0, %s38
      %s39 = sphi 0, %s36
      %s40 = sphi 0, %s39
      %s56 = sphi 0, %s40
      %s62 = sphi 0, %s64
      %s65 = sphi 0, %s62
      %s66 = sphi 0, %s65
      %s82 = sphi 0, %s66
      %s88 = sphi 0, %s90
      %s91 = sphi 0, %s88
      %s92 = sphi 0, %s91
      %s108 = sphi 0, %s92
      %s114 = sphi 0, %s116
      %s117 = sphi 0, %s114
      %s118 = sphi 0, %s117
      %s134 = sphi 0, %s118
      %s138 = sphi 0, %s138
      %s140 = sphi 0, %s138
      %s141 = sphi 0, %s140
      %s155 = sphi 0, %s141
      %s159 = sphi 0, %s159
      %s161 = sphi 0, %s159
      %s162 = sphi 0, %s161
      %s176 = sphi 0, %s162
      %s180 = sphi 0, %s180
      %s182 = sphi 0, %s180
      %s183 = sphi 0, %s182
      %s197 = sphi 0, %s183
      %s203 = sphi 0, %s205
      %s206 = sphi 0, %s203
      %s207 = sphi 0, %s206
      %s223 = sphi 0, %s207
    $region4: #{tpu_custom_call.1} parent=1 // loop_header_branch
      %29 = sbr.rel (%p27) target = $region8
    $region5: #{tpu_custom_call.1} parent=1 // loop_body
      %s31 = ssub.s32 %s26, 1
      %s32 = ssub.s32 %s26, 2
      %s33 = sadd.s32 %s26, 1
      %s34 = ssub.s32 %s26, %s33
      %p35 = scmp.eq.s32.totalorder %s34, 0
      %s37 = sadd.s32 %s36, 1
      %s38 = scalar_select %p35, %s36, %s37
      %p41 = pneg %p35
      %p42 = scmp.eq.s32.totalorder %s26, 1
      %p43 = por %p41, %p42
      %p44 = scmp.ne.s32.totalorder %s36, %s39
      %p45 = scmp.eq.s32.totalorder %s26, 0
      %p46 = por %p44, %p45
      %p47 = scmp.ne.s32.totalorder %s36, %s39
      %p48 = scmp.eq.s32.totalorder %s31, 1
      %p49 = por %p47, %p48
      %p50 = scmp.ne.s32.totalorder %s39, %s40
      %p51 = scmp.eq.s32.totalorder %s31, 0
      %p52 = por %p50, %p51
      %p53 = scmp.ne.s32.totalorder %s39, %s40
      %p54 = scmp.eq.s32.totalorder %s32, 1
      %p55 = por %p53, %p54
      %p57 = scmp.ne.s32.totalorder %s40, %s56
      %p58 = scmp.eq.s32.totalorder %s32, 0
      %p59 = por %p57, %p58
      %s60 = ssub.s32 %s26, %s33
      %p61 = scmp.eq.s32.totalorder %s60, 0
      %s63 = sadd.s32 %s62, 1
      %s64 = scalar_select %p61, %s62, %s63
      %p67 = pneg %p61
      %p68 = scmp.eq.s32.totalorder %s26, 1
      %p69 = por %p67, %p68
      %p70 = scmp.ne.s32.totalorder %s62, %s65
      %p71 = scmp.eq.s32.totalorder %s26, 0
      %p72 = por %p70, %p71
      %p73 = scmp.ne.s32.totalorder %s62, %s65
      %p74 = scmp.eq.s32.totalorder %s31, 1
      %p75 = por %p73, %p74
      %p76 = scmp.ne.s32.totalorder %s65, %s66
      %p77 = scmp.eq.s32.totalorder %s31, 0
      %p78 = por %p76, %p77
      %p79 = scmp.ne.s32.totalorder %s65, %s66
      %p80 = scmp.eq.s32.totalorder %s32, 1
      %p81 = por %p79, %p80
      %p83 = scmp.ne.s32.totalorder %s66, %s82
      %p84 = scmp.eq.s32.totalorder %s32, 0
      %p85 = por %p83, %p84
      %s86 = ssub.s32 %s26, %s33
      %p87 = scmp.eq.s32.totalorder %s86, 0
      %s89 = sadd.s32 %s88, 1
      %s90 = scalar_select %p87, %s88, %s89
      %p93 = pneg %p87
      %p94 = scmp.eq.s32.totalorder %s26, 1
      %p95 = por %p93, %p94
      %p96 = scmp.ne.s32.totalorder %s88, %s91
      %p97 = scmp.eq.s32.totalorder %s26, 0
      %p98 = por %p96, %p97
      %p99 = scmp.ne.s32.totalorder %s88, %s91
      %p100 = scmp.eq.s32.totalorder %s31, 1
      %p101 = por %p99, %p100
      %p102 = scmp.ne.s32.totalorder %s91, %s92
      %p103 = scmp.eq.s32.totalorder %s31, 0
      %p104 = por %p102, %p103
      %p105 = scmp.ne.s32.totalorder %s91, %s92
      %p106 = scmp.eq.s32.totalorder %s32, 1
      %p107 = por %p105, %p106
      %p109 = scmp.ne.s32.totalorder %s92, %s108
      %p110 = scmp.eq.s32.totalorder %s32, 0
      %p111 = por %p109, %p110
      %s112 = ssub.s32 %s26, %s33
      %p113 = scmp.eq.s32.totalorder %s112, 0
      %s115 = sadd.s32 %s114, 1
      %s116 = scalar_select %p113, %s114, %s115
      %p119 = pneg %p113
      %p120 = scmp.eq.s32.totalorder %s26, 1
      %p121 = por %p119, %p120
      %p122 = scmp.ne.s32.totalorder %s114, %s117
      %p123 = scmp.eq.s32.totalorder %s26, 0
      %p124 = por %p122, %p123
      %p125 = scmp.ne.s32.totalorder %s114, %s117
      %p126 = scmp.eq.s32.totalorder %s31, 1
      %p127 = por %p125, %p126
      %p128 = scmp.ne.s32.totalorder %s117, %s118
      %p129 = scmp.eq.s32.totalorder %s31, 0
      %p130 = por %p128, %p129
      %p131 = scmp.ne.s32.totalorder %s117, %s118
      %p132 = scmp.eq.s32.totalorder %s32, 1
      %p133 = por %p131, %p132
      %p135 = scmp.ne.s32.totalorder %s118, %s134
      %p136 = scmp.eq.s32.totalorder %s32, 0
      %p137 = por %p135, %p136
      %s139 = sadd.s32 %s138, 1
      %p142 = scmp.eq.s32.totalorder %s26, 1
      %p143 = scmp.ne.s32.totalorder %s138, %s140
      %p144 = scmp.eq.s32.totalorder %s26, 0
      %p145 = por %p143, %p144
      %p146 = scmp.ne.s32.totalorder %s138, %s140
      %p147 = scmp.eq.s32.totalorder %s31, 1
      %p148 = por %p146, %p147
      %p149 = scmp.ne.s32.totalorder %s140, %s141
      %p150 = scmp.eq.s32.totalorder %s31, 0
      %p151 = por %p149, %p150
      %p152 = scmp.ne.s32.totalorder %s140, %s141
      %p153 = scmp.eq.s32.totalorder %s32, 1
      %p154 = por %p152, %p153
      %p156 = scmp.ne.s32.totalorder %s141, %s155
      %p157 = scmp.eq.s32.totalorder %s32, 0
      %p158 = por %p156, %p157
      %s160 = sadd.s32 %s159, 1
      %p163 = scmp.eq.s32.totalorder %s26, 1
      %p164 = scmp.ne.s32.totalorder %s159, %s161
      %p165 = scmp.eq.s32.totalorder %s26, 0
      %p166 = por %p164, %p165
      %p167 = scmp.ne.s32.totalorder %s159, %s161
      %p168 = scmp.eq.s32.totalorder %s31, 1
      %p169 = por %p167, %p168
      %p170 = scmp.ne.s32.totalorder %s161, %s162
      %p171 = scmp.eq.s32.totalorder %s31, 0
      %p172 = por %p170, %p171
      %p173 = scmp.ne.s32.totalorder %s161, %s162
      %p174 = scmp.eq.s32.totalorder %s32, 1
      %p175 = por %p173, %p174
      %p177 = scmp.ne.s32.totalorder %s162, %s176
      %p178 = scmp.eq.s32.totalorder %s32, 0
      %p179 = por %p177, %p178
      %s181 = sadd.s32 %s180, 1
      %p184 = scmp.eq.s32.totalorder %s26, 1
      %p185 = scmp.ne.s32.totalorder %s180, %s182
      %p186 = scmp.eq.s32.totalorder %s26, 0
      %p187 = por %p185, %p186
      %p188 = scmp.ne.s32.totalorder %s180, %s182
      %p189 = scmp.eq.s32.totalorder %s31, 1
      %p190 = por %p188, %p189
      %p191 = scmp.ne.s32.totalorder %s182, %s183
      %p192 = scmp.eq.s32.totalorder %s31, 0
      %p193 = por %p191, %p192
      %p194 = scmp.ne.s32.totalorder %s182, %s183
      %p195 = scmp.eq.s32.totalorder %s32, 1
      %p196 = por %p194, %p195
      %p198 = scmp.ne.s32.totalorder %s183, %s197
      %p199 = scmp.eq.s32.totalorder %s32, 0
      %p200 = por %p198, %p199
      %s201 = ssub.s32 %s26, %s33
      %p202 = scmp.eq.s32.totalorder %s201, 0
      %s204 = sadd.s32 %s203, 1
      %s205 = scalar_select %p202, %s203, %s204
      %p208 = pneg %p202
      %p209 = scmp.eq.s32.totalorder %s26, 1
      %p210 = por %p208, %p209
      %p211 = scmp.ne.s32.totalorder %s203, %s206
      %p212 = scmp.eq.s32.totalorder %s26, 0
      %p213 = por %p211, %p212
      %p214 = scmp.ne.s32.totalorder %s203, %s206
      %p215 = scmp.eq.s32.totalorder %s31, 1
      %p216 = por %p214, %p215
      %p217 = scmp.ne.s32.totalorder %s206, %s207
      %p218 = scmp.eq.s32.totalorder %s31, 0
      %p219 = por %p217, %p218
      %p220 = scmp.ne.s32.totalorder %s206, %s207
      %p221 = scmp.eq.s32.totalorder %s32, 1
      %p222 = por %p220, %p221
      %p224 = scmp.ne.s32.totalorder %s207, %s223
      %p225 = scmp.eq.s32.totalorder %s32, 0
      %p226 = por %p224, %p225
      %p227 = scmp.le.s32.totalorder 1, %s26
      %p228 = scmp.lt.s32.totalorder %s26, 3
      %p229 = pnand %p227, %p228
      %p230 = pneg %p229
      // Predicated region
      $region9: #{tpu_custom_call.1} parent=5 // pred_check
        _
      $region10: #{tpu_custom_call.1} parent=5 // pred_check_branch
        %232 = sbr.rel (%p229) target = $region12
      $region11: #{tpu_custom_call.1} parent=5 // pred_region
        %s233 = ssub.s32 %s26, 1
        // Predicated region
        $region13: #{tpu_custom_call.1} parent=11 // pred_check
          %p234 = pneg %p151
        $region14: #{tpu_custom_call.1} parent=11 // pred_check_branch
          %236 = sbr.rel (%p234) target = $region16
        $region15: #{tpu_custom_call.1} parent=11 // pred_region
          %238 = vsyncadd [#allocation9], 0
          %s239 = sshll.u32 %s4, 4
          %s240 = int_to_ptr.hbm [resolvable:$true] %s239
          %s241 = sshll.u32 [#allocation10], 4
          %s242 = int_to_ptr.vmem [resolvable:$true] %s241
          %247 = dma.hbm_to_vmem [thread:$0]  %s240, 768, %s242, [#allocation9], 64, 64, 4
        $region16: #{tpu_custom_call.1} parent=11 // pred_fallthru
          _
        // Predicated region
        $region17: #{tpu_custom_call.1} parent=11 // pred_check
          %p248 = pneg %p172
        $region18: #{tpu_custom_call.1} parent=11 // pred_check_branch
          %250 = sbr.rel (%p248) target = $region20
        $region19: #{tpu_custom_call.1} parent=11 // pred_region
          %252 = vsyncadd [#allocation12], 0
          %s253 = sshll.u32 %s5, 4
          %s254 = int_to_ptr.hbm [resolvable:$true] %s253
          %s255 = sshll.u32 [#allocation11], 4
          %s256 = int_to_ptr.vmem [resolvable:$true] %s255
          %261 = dma.hbm_to_vmem [thread:$0]  %s254, 256, %s256, [#allocation12], 64, 64, 4
        $region20: #{tpu_custom_call.1} parent=11 // pred_fallthru
          _
        // Predicated region
        $region21: #{tpu_custom_call.1} parent=11 // pred_check
          %p262 = pneg %p193
        $region22: #{tpu_custom_call.1} parent=11 // pred_check_branch
          %264 = sbr.rel (%p262) target = $region24
        $region23: #{tpu_custom_call.1} parent=11 // pred_region
          _
        $region24: #{tpu_custom_call.1} parent=11 // pred_fallthru
          _
      $region12: #{tpu_custom_call.1} parent=5 // pred_fallthru
        _
      %p265 = scmp.lt.s32.totalorder %s26, 2
      // Predicated region
      $region25: #{tpu_custom_call.1} parent=5 // pred_check
        %p266 = pneg %p265
      $region26: #{tpu_custom_call.1} parent=5 // pred_check_branch
        %268 = sbr.rel (%p266) target = $region28
      $region27: #{tpu_custom_call.1} parent=5 // pred_region
        // Predicated region
        $region29: #{tpu_custom_call.1} parent=27 // pred_check
          %p269 = pneg %p46
        $region30: #{tpu_custom_call.1} parent=27 // pred_check_branch
          %271 = sbr.rel (%p269) target = $region32
        $region31: #{tpu_custom_call.1} parent=27 // pred_region
          %s272 = sand.u32 %s36, 1
          %s273 = scalar_lea.sflag [#allocation3], %s272
          %s274 = sand.u32 %s36, 1
          %s275 = smul.addr %s274, 8
          %s276 = scalar_lea.vmem [#allocation2], %s275
          %278 = vsyncadd %s273, 0
          %s279 = smul.addr %s26, 8
          %s280 = scalar_lea.hbm %s0, %s279
          %s282 = sshll.u32 %s280, 4
          %s283 = int_to_ptr.hbm [resolvable:$true] %s282
          %s284 = sshll.u32 %s276, 4
          %s285 = int_to_ptr.vmem [resolvable:$true] %s284
          %287 = dma.hbm_to_vmem [thread:$0]  %s283, 128, %s285, %s273
        $region32: #{tpu_custom_call.1} parent=27 // pred_fallthru
          _
        // Predicated region
        $region33: #{tpu_custom_call.1} parent=27 // pred_check
          %p288 = pneg %p72
        $region34: #{tpu_custom_call.1} parent=27 // pred_check_branch
          %290 = sbr.rel (%p288) target = $region36
        $region35: #{tpu_custom_call.1} parent=27 // pred_region
          %s291 = sand.u32 %s26, 1
          %s292 = scalar_lea.sflag [#allocation6], %s291
          %s293 = sand.u32 %s62, 1
          %s294 = smul.addr %s293, 8
          %s295 = scalar_lea.vmem [#allocation5], %s294
          %297 = vsyncadd %s292, 0
          %s298 = smul.addr %s26, 8
          %s299 = scalar_lea.hbm %s1, %s298
          %s301 = sshll.u32 %s299, 4
          %s302 = int_to_ptr.hbm [resolvable:$true] %s301
          %s303 = sshll.u32 %s295, 4
          %s304 = int_to_ptr.vmem [resolvable:$true] %s303
          %306 = dma.hbm_to_vmem [thread:$0]  %s302, 128, %s304, %s292
        $region36: #{tpu_custom_call.1} parent=27 // pred_fallthru
          _
        // Predicated region
        $region37: #{tpu_custom_call.1} parent=27 // pred_check
          %p307 = pneg %p98
        $region38: #{tpu_custom_call.1} parent=27 // pred_check_branch
          %309 = sbr.rel (%p307) target = $region40
        $region39: #{tpu_custom_call.1} parent=27 // pred_region
          %s310 = sand.u32 %s26, 1
          %s311 = scalar_lea.sflag [#allocation6], %s310
          %s312 = sand.u32 %s88, 1
          %s313 = smul.addr %s312, 8
          %s314 = scalar_lea.vmem [#allocation7], %s313
          %316 = vsyncadd %s311, 0
          %s317 = smul.addr %s26, 8
          %s318 = scalar_lea.hbm %s2, %s317
          %s320 = sshll.u32 %s318, 4
          %s321 = int_to_ptr.hbm [resolvable:$true] %s320
          %s322 = sshll.u32 %s314, 4
          %s323 = int_to_ptr.vmem [resolvable:$true] %s322
          %325 = dma.hbm_to_vmem [thread:$0]  %s321, 128, %s323, %s311
        $region40: #{tpu_custom_call.1} parent=27 // pred_fallthru
          _
        // Predicated region
        $region41: #{tpu_custom_call.1} parent=27 // pred_check
          %p326 = pneg %p124
        $region42: #{tpu_custom_call.1} parent=27 // pred_check_branch
          %328 = sbr.rel (%p326) target = $region44
        $region43: #{tpu_custom_call.1} parent=27 // pred_region
          %s329 = sand.u32 %s26, 1
          %s330 = scalar_lea.sflag [#allocation9], %s329
          %s331 = sand.u32 %s114, 1
          %s332 = smul.addr %s331, 8
          %s333 = scalar_lea.vmem [#allocation8], %s332
          %335 = vsyncadd %s330, 0
          %s336 = smul.addr %s26, 8
          %s337 = scalar_lea.hbm %s3, %s336
          %s339 = sshll.u32 %s337, 4
          %s340 = int_to_ptr.hbm [resolvable:$true] %s339
          %s341 = sshll.u32 %s333, 4
          %s342 = int_to_ptr.vmem [resolvable:$true] %s341
          %344 = dma.hbm_to_vmem [thread:$0]  %s340, 128, %s342, %s330
        $region44: #{tpu_custom_call.1} parent=27 // pred_fallthru
          _
      $region28: #{tpu_custom_call.1} parent=5 // pred_fallthru
        _
      %p345 = scmp.le.s32.totalorder 1, %s26
      %p346 = scmp.lt.s32.totalorder %s26, 3
      %p347 = pnand %p345, %p346
      %p348 = pneg %p347
      // Predicated region
      $region45: #{tpu_custom_call.1} parent=5 // pred_check
        _
      $region46: #{tpu_custom_call.1} parent=5 // pred_check_branch
        %350 = sbr.rel (%p347) target = $region48
      $region47: #{tpu_custom_call.1} parent=5 // pred_region
        %s351 = ssub.s32 %s26, 1
        %s352 = sand.u32 %s39, 1
        %s353 = scalar_lea.sflag [#allocation3], %s352
        %s354 = sand.u32 %s39, 1
        %s355 = smul.addr %s354, 8
        %s356 = scalar_lea.vmem [#allocation2], %s355
        // Predicated region
        $region49: #{tpu_custom_call.1} parent=47 // pred_check
          %p357 = pneg %p52
        $region50: #{tpu_custom_call.1} parent=47 // pred_check_branch
          %359 = sbr.rel (%p357) target = $region52
        $region51: #{tpu_custom_call.1} parent=47 // pred_region
          %361 = dma.done %s353, 128
        $region52: #{tpu_custom_call.1} parent=47 // pred_fallthru
          _
        %s362 = sand.u32 %s31, 1
        %s363 = scalar_lea.sflag [#allocation6], %s362
        %s364 = sand.u32 %s65, 1
        %s365 = smul.addr %s364, 8
        %s366 = scalar_lea.vmem [#allocation5], %s365
        // Predicated region
        $region53: #{tpu_custom_call.1} parent=47 // pred_check
          %p367 = pneg %p78
        $region54: #{tpu_custom_call.1} parent=47 // pred_check_branch
          %369 = sbr.rel (%p367) target = $region56
        $region55: #{tpu_custom_call.1} parent=47 // pred_region
          %371 = dma.done %s363, 128
        $region56: #{tpu_custom_call.1} parent=47 // pred_fallthru
          _
        %s372 = sand.u32 %s31, 1
        %s373 = scalar_lea.sflag [#allocation6], %s372
        %s374 = sand.u32 %s91, 1
        %s375 = smul.addr %s374, 8
        %s376 = scalar_lea.vmem [#allocation7], %s375
        // Predicated region
        $region57: #{tpu_custom_call.1} parent=47 // pred_check
          %p377 = pneg %p104
        $region58: #{tpu_custom_call.1} parent=47 // pred_check_branch
          %379 = sbr.rel (%p377) target = $region60
        $region59: #{tpu_custom_call.1} parent=47 // pred_region
          %381 = dma.done %s373, 128
        $region60: #{tpu_custom_call.1} parent=47 // pred_fallthru
          _
        %s382 = sand.u32 %s31, 1
        %s383 = scalar_lea.sflag [#allocation9], %s382
        %s384 = sand.u32 %s117, 1
        %s385 = smul.addr %s384, 8
        %s386 = scalar_lea.vmem [#allocation8], %s385
        // Predicated region
        $region61: #{tpu_custom_call.1} parent=47 // pred_check
          %p387 = pneg %p130
        $region62: #{tpu_custom_call.1} parent=47 // pred_check_branch
          %389 = sbr.rel (%p387) target = $region64
        $region63: #{tpu_custom_call.1} parent=47 // pred_region
          %391 = dma.done %s383, 128
        $region64: #{tpu_custom_call.1} parent=47 // pred_fallthru
          _
        // Predicated region
        $region65: #{tpu_custom_call.1} parent=47 // pred_check
          %p392 = pneg %p151
        $region66: #{tpu_custom_call.1} parent=47 // pred_check_branch
          %394 = sbr.rel (%p392) target = $region68
        $region67: #{tpu_custom_call.1} parent=47 // pred_region
          %396 = dma.done [#allocation9], 768
        $region68: #{tpu_custom_call.1} parent=47 // pred_fallthru
          _
        // Predicated region
        $region69: #{tpu_custom_call.1} parent=47 // pred_check
          %p397 = pneg %p172
        $region70: #{tpu_custom_call.1} parent=47 // pred_check_branch
          %399 = sbr.rel (%p397) target = $region72
        $region71: #{tpu_custom_call.1} parent=47 // pred_region
          %401 = dma.done [#allocation12], 256
        $region72: #{tpu_custom_call.1} parent=47 // pred_fallthru
          _
        %s402 = sand.u32 %s39, 1
        %s403 = scalar_lea.sflag [#allocation3], %s402
        %s404 = sand.u32 %s39, 1
        %s405 = smul.addr %s404, 8
        %s406 = scalar_lea.vmem [#allocation2], %s405
        %p407 = pneg %p52
        %p408 = pneg %p49
        %s409 = sand.u32 %s31, 1
        %s410 = scalar_lea.sflag [#allocation6], %s409
        %s411 = sand.u32 %s65, 1
        %s412 = smul.addr %s411, 8
        %s413 = scalar_lea.vmem [#allocation5], %s412
        %p414 = pneg %p78
        %p415 = pneg %p75
        %s416 = sand.u32 %s31, 1
        %s417 = scalar_lea.sflag [#allocation6], %s416
        %s418 = sand.u32 %s91, 1
        %s419 = smul.addr %s418, 8
        %s420 = scalar_lea.vmem [#allocation7], %s419
        %p421 = pneg %p104
        %p422 = pneg %p101
        %s423 = sand.u32 %s31, 1
        %s424 = scalar_lea.sflag [#allocation9], %s423
        %s425 = sand.u32 %s117, 1
        %s426 = smul.addr %s425, 8
        %s427 = scalar_lea.vmem [#allocation8], %s426
        %p428 = pneg %p130
        %p429 = pneg %p127
        %p430 = pneg %p151
        %p431 = pneg %p148
        %p432 = pneg %p172
        %p433 = pneg %p169
        %p434 = pneg %p193
        %p435 = pneg %p190
        %p436 = pneg %p219
        %p437 = pneg %p216
        %s438 = sand.u32 %s206, 1
        %s439 = scalar_lea.sflag [#allocation4], %s438
        %s440 = sand.u32 %s206, 1
        %s441 = smul.addr %s440, 8
        %s442 = scalar_lea.vmem [#allocation13], %s441
        %v444 = vld [vmem:[%s356] sm:$0xff]
        %v445 = vpack.c.bf16 %v444, %v444
        %v446 = vld [vmem:[%s366] sm:$0xff]
        %v447 = vpack.c.bf16 %v446, %v446
        %v448 = vld [vmem:[%s376] sm:$0xff]
        %v449 = vpack.c.bf16 %v448, %v448
        %v451 = vunpack.c.l.b16 %v447
        %v452 = vpack.c.b16 %v451, %v451
        %453 = vrot.lane.b32.xlu0 %v452, 32
        %v454 = vpop.permute.xlu0 %453
        %v456 = vunpack.c.l.b16 %v449
        %v457 = vpack.c.b16 %v456, %v456
        %458 = vrot.lane.b32.xlu0 %v457, 64
        %v459 = vpop.permute.xlu0 %458
        %vm460 = vcmask 261120
        %v463 = vsel %vm460, %v445, %v454
        %vm464 = vcmask 523264
        %v466 = vsel %vm464, %v463, %v459
        %v467 = vld [vmem:[#allocation10] sm:$0xf]
        %v468 = vld [vmem:[#allocation10 + $0x4] sm:$0xf]
        %v469 = vld [vmem:[#allocation10 + $0x8] sm:$0xf]
        %v470 = vld [vmem:[#allocation10 + $0xc] sm:$0xf]
        %v471 = vld [vmem:[#allocation10 + $0x10] sm:$0xf]
        %v472 = vld [vmem:[#allocation10 + $0x14] sm:$0xf]
        %v473 = vld [vmem:[#allocation10 + $0x18] sm:$0xf]
        %v474 = vld [vmem:[#allocation10 + $0x1c] sm:$0xf]
        %v475 = vld [vmem:[#allocation10 + $0x20] sm:$0xf]
        %v476 = vld [vmem:[#allocation10 + $0x24] sm:$0xf]
        %v477 = vld [vmem:[#allocation10 + $0x28] sm:$0xf]
        %v478 = vld [vmem:[#allocation10 + $0x2c] sm:$0xf]
        %v491 = vunpack.c.l.b16 %v467
        %v492 = vunpack.c.l.b16 %v468
        %v493 = vunpack.c.l.b16 %v469
        %v494 = vunpack.c.l.b16 %v470
        %v495 = vunpack.c.l.b16 %v471
        %v496 = vunpack.c.l.b16 %v472
        %v497 = vunpack.c.l.b16 %v473
        %v498 = vunpack.c.l.b16 %v474
        %v499 = vunpack.c.l.b16 %v475
        %v500 = vunpack.c.l.b16 %v476
        %v501 = vunpack.c.l.b16 %v477
        %v502 = vunpack.c.l.b16 %v478
        %v503 = vpack.c.b16 %v492, %v491
        %v504 = vpack.c.b16 %v494, %v493
        %v505 = vpack.c.b16 %v496, %v495
        %v506 = vpack.c.b16 %v498, %v497
        %v507 = vpack.c.b16 %v500, %v499
        %v508 = vpack.c.b16 %v502, %v501
        %vm515 = vcmask 785408
        %v516 = vsel %vm515, %v466, 0
        %518 = vmatpush.bf16.msra.mxu0 0
        %519 = vmatpush.bf16.msra.mxu0 0
        %520 = vmatpush.bf16.msra.mxu0 %v508
        %521 = vmatpush.bf16.msra.mxu0 %v507
        %522 = vmatpush.bf16.msra.mxu0 %v506
        %523 = vmatpush.bf16.msra.mxu0 %v505
        %524 = vmatpush.bf16.msra.mxu0 %v504
        %525 = vmatpush.bf16.msra.mxu0 %v503
        %526 = vmatmul.bf16.gmra.mxu0 %v516
        %v527 = vpop.f32.mrf.mxu0
        %v528 = vadd.f32 0.0, %v527
        %v529 = vpop.f32.mrf.mxu0
        %530 = vdwg.mxu0
        %532 = vrot.lane.b32.xlu0 %v528, 120
        %v533 = vpop.permute.xlu0 %532
        %535 = vrot.lane.b32.xlu0 %v528, 112
        %v536 = vpop.permute.xlu0 %535
        %538 = vrot.lane.b32.xlu0 %v528, 104
        %v539 = vpop.permute.xlu0 %538
        %541 = vrot.lane.b32.xlu0 %v528, 96
        %v542 = vpop.permute.xlu0 %541
        %544 = vrot.lane.b32.xlu0 %v528, 88
        %v545 = vpop.permute.xlu0 %544
        %547 = vrot.lane.b32.xlu0 %v528, 80
        %v548 = vpop.permute.xlu0 %547
        %550 = vrot.lane.b32.xlu0 %v528, 72
        %v551 = vpop.permute.xlu0 %550
        %553 = vrot.lane.b32.xlu0 %v528, 64
        %v554 = vpop.permute.xlu0 %553
        %556 = vrot.lane.b32.xlu0 %v528, 56
        %v557 = vpop.permute.xlu0 %556
        %559 = vrot.lane.b32.xlu0 %v528, 48
        %v560 = vpop.permute.xlu0 %559
        %562 = vrot.lane.b32.xlu0 %v528, 40
        %v563 = vpop.permute.xlu0 %562
        %v565 = vpack.c.bf16 %v528, %v528
        %v566 = vpack.c.bf16 %v533, %v533
        %v567 = vpack.c.bf16 %v536, %v536
        %v568 = vpack.c.bf16 %v539, %v539
        %v569 = vpack.c.bf16 %v542, %v542
        %v570 = vpack.c.bf16 %v545, %v545
        %v571 = vpack.c.bf16 %v548, %v548
        %v572 = vpack.c.bf16 %v551, %v551
        %v573 = vpack.c.bf16 %v554, %v554
        %v574 = vpack.c.bf16 %v557, %v557
        %v575 = vpack.c.bf16 %v560, %v560
        %v576 = vpack.c.bf16 %v563, %v563
        %vm577 = vcmask 64512
        %v579 = vsel %vm577, %v565, 0
        %v582 = vsel %vm577, %v569, 0
        %584 = vmatpush.bf16.xpose.msra.mxu0 0
        %585 = vmatpush.bf16.xpose.msra.mxu0 0
        %586 = vmatpush.bf16.xpose.msra.mxu0 0
        %587 = vmatpush.bf16.xpose.msra.mxu0 0
        %588 = vmatpush.bf16.xpose.msra.mxu0 0
        %589 = vmatpush.bf16.xpose.msra.mxu0 0
        %590 = vmatpush.bf16.xpose.msra.mxu0 0
        %591 = vmatpush.bf16.xpose.msra.mxu0 %v582
        %592 = vmatmul.bf16.gmra.mxu0 %v579
        %v593 = vpop.f32.mrf.mxu0
        %v594 = vadd.f32 0.0, %v593
        %v595 = vpop.f32.mrf.mxu0
        %596 = vdwg.mxu0
        %v598 = vsel %vm577, %v566, 0
        %v601 = vsel %vm577, %v570, 0
        %603 = vmatpush.bf16.xpose.msra.mxu0 0
        %604 = vmatpush.bf16.xpose.msra.mxu0 0
        %605 = vmatpush.bf16.xpose.msra.mxu0 0
        %606 = vmatpush.bf16.xpose.msra.mxu0 0
        %607 = vmatpush.bf16.xpose.msra.mxu0 0
        %608 = vmatpush.bf16.xpose.msra.mxu0 0
        %609 = vmatpush.bf16.xpose.msra.mxu0 0
        %610 = vmatpush.bf16.xpose.msra.mxu0 %v601
        %611 = vmatmul.bf16.gmra.mxu0 %v598
        %v612 = vpop.f32.mrf.mxu0
        %v613 = vadd.f32 0.0, %v612
        %v614 = vpop.f32.mrf.mxu0
        %615 = vdwg.mxu0
        %v617 = vsel %vm577, %v567, 0
        %v620 = vsel %vm577, %v571, 0
        %622 = vmatpush.bf16.xpose.msra.mxu0 0
        %623 = vmatpush.bf16.xpose.msra.mxu0 0
        %624 = vmatpush.bf16.xpose.msra.mxu0 0
        %625 = vmatpush.bf16.xpose.msra.mxu0 0
        %626 = vmatpush.bf16.xpose.msra.mxu0 0
        %627 = vmatpush.bf16.xpose.msra.mxu0 0
        %628 = vmatpush.bf16.xpose.msra.mxu0 0
        %629 = vmatpush.bf16.xpose.msra.mxu0 %v620
        %630 = vmatmul.bf16.gmra.mxu0 %v617
        %v631 = vpop.f32.mrf.mxu0
        %v632 = vadd.f32 0.0, %v631
        %v633 = vpop.f32.mrf.mxu0
        %634 = vdwg.mxu0
        %v636 = vsel %vm577, %v568, 0
        %v639 = vsel %vm577, %v572, 0
        %641 = vmatpush.bf16.xpose.msra.mxu0 0
        %642 = vmatpush.bf16.xpose.msra.mxu0 0
        %643 = vmatpush.bf16.xpose.msra.mxu0 0
        %644 = vmatpush.bf16.xpose.msra.mxu0 0
        %645 = vmatpush.bf16.xpose.msra.mxu0 0
        %646 = vmatpush.bf16.xpose.msra.mxu0 0
        %647 = vmatpush.bf16.xpose.msra.mxu0 0
        %648 = vmatpush.bf16.xpose.msra.mxu0 %v639
        %649 = vmatmul.bf16.gmra.mxu0 %v636
        %v650 = vpop.f32.mrf.mxu0
        %v651 = vadd.f32 0.0, %v650
        %v652 = vpop.f32.mrf.mxu0
        %653 = vdwg.mxu0
        %v654 = vld [vmem:[%s386] sm:$0xff]
        %v655 = vadd.f32 %v594, %v654
        %v656 = vadd.f32 %v613, %v654
        %v657 = vadd.f32 %v632, %v654
        %v658 = vadd.f32 %v651, %v654
        %v659 = vsel %vm577, %v655, -inf
        %660 = vmax.xlane.f32.xlu0 %v659
        %v661 = vpop.xlane.xlu0 %660
        %v662 = vsel %vm577, %v656, -inf
        %663 = vmax.xlane.f32.xlu0 %v662
        %v664 = vpop.xlane.xlu0 %663
        %v665 = vsel %vm577, %v657, -inf
        %666 = vmax.xlane.f32.xlu0 %v665
        %v667 = vpop.xlane.xlu0 %666
        %v668 = vsel %vm577, %v658, -inf
        %669 = vmax.xlane.f32.xlu0 %v668
        %v670 = vpop.xlane.xlu0 %669
        %v671 = vsub.f32 %v655, %v661
        %v672 = vsub.f32 %v656, %v664
        %v673 = vsub.f32 %v657, %v667
        %v674 = vsub.f32 %v658, %v670
        %v675 = vmul.f32 %v671, 1.442695
        %v676 = vpow.pop %v675
        %v677 = vmul.f32 %v672, 1.442695
        %v678 = vpow.pop %v677
        %v679 = vmul.f32 %v673, 1.442695
        %v680 = vpow.pop %v679
        %v681 = vmul.f32 %v674, 1.442695
        %v682 = vpow.pop %v681
        %v683 = vsel %vm577, %v676, 0.0
        %684 = vadd.xlane.f32.xlu0 %v683
        %v685 = vpop.xlane.xlu0 %684
        %v686 = vsel %vm577, %v678, 0.0
        %687 = vadd.xlane.f32.xlu0 %v686
        %v688 = vpop.xlane.xlu0 %687
        %v689 = vsel %vm577, %v680, 0.0
        %690 = vadd.xlane.f32.xlu0 %v689
        %v691 = vpop.xlane.xlu0 %690
        %v692 = vsel %vm577, %v682, 0.0
        %693 = vadd.xlane.f32.xlu0 %v692
        %v694 = vpop.xlane.xlu0 %693
        %v695 = vrcp.pop %v685
        %v696 = vrcp.pop %v688
        %v697 = vrcp.pop %v691
        %v698 = vrcp.pop %v694
        %v699 = vmul.f32 %v685, %v695
        %v700 = vmul.f32 %v688, %v696
        %v701 = vmul.f32 %v691, %v697
        %v702 = vmul.f32 %v694, %v698
        %v703 = vsub.f32 2.0, %v699
        %v704 = vsub.f32 2.0, %v700
        %v705 = vsub.f32 2.0, %v701
        %v706 = vsub.f32 2.0, %v702
        %v707 = vmul.f32 %v695, %v703
        %v708 = vmul.f32 %v696, %v704
        %v709 = vmul.f32 %v697, %v705
        %v710 = vmul.f32 %v698, %v706
        %v711 = vmul.f32 %v676, %v707
        %v712 = vmul.f32 %v678, %v708
        %v713 = vmul.f32 %v680, %v709
        %v714 = vmul.f32 %v682, %v710
        %v715 = vpack.c.bf16 %v711, %v711
        %v716 = vpack.c.bf16 %v712, %v712
        %v717 = vpack.c.bf16 %v713, %v713
        %v718 = vpack.c.bf16 %v714, %v714
        %v720 = vsel %vm577, %v715, 0
        %vm722 = vcmask 1043456
        %v724 = vsel %vm722, %v573, 0
        %726 = vmatpush.bf16.msra.mxu0 0
        %727 = vmatpush.bf16.msra.mxu0 0
        %728 = vmatpush.bf16.msra.mxu0 0
        %729 = vmatpush.bf16.msra.mxu0 0
        %730 = vmatpush.bf16.msra.mxu0 0
        %731 = vmatpush.bf16.msra.mxu0 0
        %732 = vmatpush.bf16.msra.mxu0 0
        %733 = vmatpush.bf16.msra.mxu0 %v724
        %734 = vmatmul.bf16.gmra.mxu0 %v720
        %v735 = vpop.f32.mrf.mxu0
        %v736 = vadd.f32 0.0, %v735
        %v737 = vpop.f32.mrf.mxu0
        %738 = vdwg.mxu0
        %v740 = vsel %vm577, %v716, 0
        %v743 = vsel %vm722, %v574, 0
        %745 = vmatpush.bf16.msra.mxu0 0
        %746 = vmatpush.bf16.msra.mxu0 0
        %747 = vmatpush.bf16.msra.mxu0 0
        %748 = vmatpush.bf16.msra.mxu0 0
        %749 = vmatpush.bf16.msra.mxu0 0
        %750 = vmatpush.bf16.msra.mxu0 0
        %751 = vmatpush.bf16.msra.mxu0 0
        %752 = vmatpush.bf16.msra.mxu0 %v743
        %753 = vmatmul.bf16.gmra.mxu0 %v740
        %v754 = vpop.f32.mrf.mxu0
        %v755 = vadd.f32 0.0, %v754
        %v756 = vpop.f32.mrf.mxu0
        %757 = vdwg.mxu0
        %v759 = vsel %vm577, %v717, 0
        %v762 = vsel %vm722, %v575, 0
        %764 = vmatpush.bf16.msra.mxu0 0
        %765 = vmatpush.bf16.msra.mxu0 0
        %766 = vmatpush.bf16.msra.mxu0 0
        %767 = vmatpush.bf16.msra.mxu0 0
        %768 = vmatpush.bf16.msra.mxu0 0
        %769 = vmatpush.bf16.msra.mxu0 0
        %770 = vmatpush.bf16.msra.mxu0 0
        %771 = vmatpush.bf16.msra.mxu0 %v762
        %772 = vmatmul.bf16.gmra.mxu0 %v759
        %v773 = vpop.f32.mrf.mxu0
        %v774 = vadd.f32 0.0, %v773
        %v775 = vpop.f32.mrf.mxu0
        %776 = vdwg.mxu0
        %v778 = vsel %vm577, %v718, 0
        %v781 = vsel %vm722, %v576, 0
        %783 = vmatpush.bf16.msra.mxu0 0
        %784 = vmatpush.bf16.msra.mxu0 0
        %785 = vmatpush.bf16.msra.mxu0 0
        %786 = vmatpush.bf16.msra.mxu0 0
        %787 = vmatpush.bf16.msra.mxu0 0
        %788 = vmatpush.bf16.msra.mxu0 0
        %789 = vmatpush.bf16.msra.mxu0 0
        %790 = vmatpush.bf16.msra.mxu0 %v781
        %791 = vmatmul.bf16.gmra.mxu0 %v778
        %v792 = vpop.f32.mrf.mxu0
        %v793 = vadd.f32 0.0, %v792
        %v794 = vpop.f32.mrf.mxu0
        %795 = vdwg.mxu0
        %v796 = vld [vmem:[%s6] sm:$0x1]
        %v798 = vperm.slane %v796, 0
        %v800 = vpack.c.bf16 %v736, %v736
        %v801 = vld [vmem:[#allocation11] sm:$0xf]
        %v803 = vsel %vm577, %v800, 0
        %v806 = vsel %vm722, %v801, 0
        %808 = vmatpush.bf16.msra.mxu0 0
        %809 = vmatpush.bf16.msra.mxu0 0
        %810 = vmatpush.bf16.msra.mxu0 0
        %811 = vmatpush.bf16.msra.mxu0 0
        %812 = vmatpush.bf16.msra.mxu0 0
        %813 = vmatpush.bf16.msra.mxu0 0
        %814 = vmatpush.bf16.msra.mxu0 0
        %815 = vmatpush.bf16.msra.mxu0 %v806
        %816 = vmatmul.bf16.gmra.mxu0 %v803
        %v817 = vpop.f32.mrf.mxu0
        %v818 = vadd.f32 0.0, %v817
        %v819 = vpop.f32.mrf.mxu0
        %820 = vdwg.mxu0
        %v821 = vadd.f32 %v798, %v818
        %v822 = vpack.c.bf16 %v755, %v755
        %s823 = scalar_lea.vmem [#allocation11], 4
        %v824 = vld [vmem:[%s823] sm:$0xf]
        %v826 = vsel %vm577, %v822, 0
        %v829 = vsel %vm722, %v824, 0
        %831 = vmatpush.bf16.msra.mxu0 0
        %832 = vmatpush.bf16.msra.mxu0 0
        %833 = vmatpush.bf16.msra.mxu0 0
        %834 = vmatpush.bf16.msra.mxu0 0
        %835 = vmatpush.bf16.msra.mxu0 0
        %836 = vmatpush.bf16.msra.mxu0 0
        %837 = vmatpush.bf16.msra.mxu0 0
        %838 = vmatpush.bf16.msra.mxu0 %v829
        %839 = vmatmul.bf16.gmra.mxu0 %v826
        %v840 = vpop.f32.mrf.mxu0
        %v841 = vadd.f32 0.0, %v840
        %v842 = vpop.f32.mrf.mxu0
        %843 = vdwg.mxu0
        %v844 = vadd.f32 %v821, %v841
        %v845 = vpack.c.bf16 %v774, %v774
        %s846 = scalar_lea.vmem [#allocation11], 8
        %v847 = vld [vmem:[%s846] sm:$0xf]
        %v849 = vsel %vm577, %v845, 0
        %v852 = vsel %vm722, %v847, 0
        %854 = vmatpush.bf16.msra.mxu0 0
        %855 = vmatpush.bf16.msra.mxu0 0
        %856 = vmatpush.bf16.msra.mxu0 0
        %857 = vmatpush.bf16.msra.mxu0 0
        %858 = vmatpush.bf16.msra.mxu0 0
        %859 = vmatpush.bf16.msra.mxu0 0
        %860 = vmatpush.bf16.msra.mxu0 0
        %861 = vmatpush.bf16.msra.mxu0 %v852
        %862 = vmatmul.bf16.gmra.mxu0 %v849
        %v863 = vpop.f32.mrf.mxu0
        %v864 = vadd.f32 0.0, %v863
        %v865 = vpop.f32.mrf.mxu0
        %866 = vdwg.mxu0
        %v867 = vadd.f32 %v844, %v864
        %v868 = vpack.c.bf16 %v793, %v793
        %s869 = scalar_lea.vmem [#allocation11], 12
        %v870 = vld [vmem:[%s869] sm:$0xf]
        %v872 = vsel %vm577, %v868, 0
        %v875 = vsel %vm722, %v870, 0
        %877 = vmatpush.bf16.msra.mxu0 0
        %878 = vmatpush.bf16.msra.mxu0 0
        %879 = vmatpush.bf16.msra.mxu0 0
        %880 = vmatpush.bf16.msra.mxu0 0
        %881 = vmatpush.bf16.msra.mxu0 0
        %882 = vmatpush.bf16.msra.mxu0 0
        %883 = vmatpush.bf16.msra.mxu0 0
        %884 = vmatpush.bf16.msra.mxu0 %v875
        %885 = vmatmul.bf16.gmra.mxu0 %v872
        %v886 = vpop.f32.mrf.mxu0
        %v887 = vadd.f32 0.0, %v886
        %v888 = vpop.f32.mrf.mxu0
        %889 = vdwg.mxu0
        %v890 = vadd.f32 %v867, %v887
        %891 = vst.msk [vmem:[%s442] sm:$0xff] %vm460, %v890
        %s892 = sand.u32 %s206, 1
        %s893 = scalar_lea.sflag [#allocation4], %s892
        %s894 = sand.u32 %s206, 1
        %s895 = smul.addr %s894, 8
        %s896 = scalar_lea.vmem [#allocation13], %s895
        // Predicated region
        $region73: #{tpu_custom_call.1} parent=47 // pred_check
          %p897 = pneg %p216
        $region74: #{tpu_custom_call.1} parent=47 // pred_check_branch
          %899 = sbr.rel (%p897) target = $region76
        $region75: #{tpu_custom_call.1} parent=47 // pred_region
          %901 = vsyncadd %s893, 0
          %s902 = smul.addr %s31, 8
          %s903 = scalar_lea.hbm %s7, %s902
          %s905 = sshll.u32 %s896, 4
          %s906 = int_to_ptr.vmem [resolvable:$true] %s905
          %s907 = sshll.u32 %s903, 4
          %s908 = int_to_ptr.hbm [resolvable:$true] %s907
          %910 = dma.vmem_to_hbm [thread:$0]  %s906, 128, %s908, %s893
        $region76: #{tpu_custom_call.1} parent=47 // pred_fallthru
          _
      $region48: #{tpu_custom_call.1} parent=5 // pred_fallthru
        _
      %p911 = scmp.le.s32.totalorder 2, %s26
      // Predicated region
      $region77: #{tpu_custom_call.1} parent=5 // pred_check
        %p912 = pneg %p911
      $region78: #{tpu_custom_call.1} parent=5 // pred_check_branch
        %914 = sbr.rel (%p912) target = $region80
      $region79: #{tpu_custom_call.1} parent=5 // pred_region
        %s915 = ssub.s32 %s26, 2
        // Predicated region
        $region81: #{tpu_custom_call.1} parent=79 // pred_check
          %p916 = pneg %p222
        $region82: #{tpu_custom_call.1} parent=79 // pred_check_branch
          %918 = sbr.rel (%p916) target = $region84
        $region83: #{tpu_custom_call.1} parent=79 // pred_region
          %s919 = sand.u32 %s207, 1
          %s920 = scalar_lea.sflag [#allocation4], %s919
          %s921 = sand.u32 %s207, 1
          %s922 = smul.addr %s921, 8
          %s923 = scalar_lea.vmem [#allocation13], %s922
          %925 = dma.done %s920, 128
        $region84: #{tpu_custom_call.1} parent=79 // pred_fallthru
          _
      $region80: #{tpu_custom_call.1} parent=5 // pred_fallthru
        _
    $region6: #{tpu_custom_call.1} parent=1 // loop_footer
      %s30 = sadd.s32 1, %s26
    $region7: #{tpu_custom_call.1} parent=1 // loop_footer_branch
      %25 = sbr.rel target = $region3
    $region8: #{tpu_custom_call.1} parent=1 // loop_exit
      _
    %926 = vsyncpa [#allocation3], 1
    %s927 = scalar_lea.sflag [#allocation3], 1
    %928 = vsyncpa %s927, 1
    %929 = vsyncpa [#allocation6], 1
    %s930 = scalar_lea.sflag [#allocation6], 1
    %931 = vsyncpa %s930, 1
    %932 = vsyncpa [#allocation9], 1
    %s933 = scalar_lea.sflag [#allocation9], 1
    %934 = vsyncpa %s933, 1
    %935 = vsyncpa [#allocation12], 1
    %936 = vsyncpa [#allocation4], 1
    %s937 = scalar_lea.sflag [#allocation4], 1
    %938 = vsyncpa %s937, 1

</llo_original>
